<compile_context>
chip_gen: v6e
topology: v6e:2x2x1
jax: 0.10.0
libtpu: 0.0.40
codegen_flags: <defaults>
</compile_context>

<pallas_src>
import jax
import jax.numpy as jnp
from jax.experimental import pallas as pl
from jax.experimental.pallas import tpu as pltpu

HIDDEN = 256


def _round_up(x, m):
    return (x + m - 1) // m * m


def _critic_kernel(s_ref, a_ref,
                   w14s_ref, w14a_ref, b14_ref,
                   w2_ref, b2_ref, w5_ref, b5_ref,
                   w3p_ref, w6p_ref, b36_ref,
                   q_ref):
    """One batch tile: both Q heads, fused layer-1 and fused output layer."""
    s16 = s_ref[...].astype(jnp.bfloat16)            # [TB, S]
    a16 = a_ref[...].astype(jnp.bfloat16)            # [TB, A]

    # Layer 1, both heads at once:  [s|a] @ [W1|W4] + [b1|b4]  -> [TB, 512]
    h_all = (jnp.dot(s16, w14s_ref[...], preferred_element_type=jnp.float32)
             + jnp.dot(a16, w14a_ref[...], preferred_element_type=jnp.float32)
             + b14_ref[...])
    h_all = jnp.maximum(h_all, 0.0)                  # ReLU in f32

    h = h_all[:, :HIDDEN].astype(jnp.bfloat16)       # Q1 hidden
    g = h_all[:, HIDDEN:].astype(jnp.bfloat16)       # Q2 hidden

    # Layer 2 per head (different inputs, so two 256x256 matmuls).
    h2 = jnp.maximum(
        jnp.dot(h, w2_ref[...], preferred_element_type=jnp.float32) + b2_ref[...], 0.0)
    g2 = jnp.maximum(
        jnp.dot(g, w5_ref[...], preferred_element_type=jnp.float32) + g5b(b5_ref), 0.0)

    # Output layer: w3 sits in column 0 of w3p (column 1 zero), w6 in column 1
    # of w6p (column 0 zero).  Summing the two dots gives q1 in col 0 and q2
    # in col 1 without any lane concat; b3/b6 are folded into b36 ([1, 2]).
    q = (jnp.dot(h2.astype(jnp.bfloat16), w3p_ref[...],
                 preferred_element_type=jnp.float32)
         + jnp.dot(g2.astype(jnp.bfloat16), w6p_ref[...],
                   preferred_element_type=jnp.float32)
         + b36_ref[...])
    q_ref[...] = q.astype(q_ref.dtype)


def g5b(b5_ref):
    return b5_ref[...]


def prepare_params(params, state_dim):
    """One-time weight preparation (call once, reuse every forward)."""
    w1 = jnp.asarray(params["w1"], jnp.float32)      # [S+A, 256]
    w4 = jnp.asarray(params["w4"], jnp.float32)      # [S+A, 256]
    w14 = jnp.concatenate([w1, w4], axis=1)          # [S+A, 512]

    w3p = jnp.zeros((HIDDEN, 2), jnp.float32)
    w3p = w3p.at[:, 0].set(jnp.asarray(params["w3"], jnp.float32)[:, 0])
    w6p = jnp.zeros((HIDDEN, 2), jnp.float32)
    w6p = w6p.at[:, 1].set(jnp.asarray(params["w6"], jnp.float32)[:, 0])

    prep = {
        "w14_s": w14[:state_dim].astype(jnp.bfloat16),   # [S, 512]
        "w14_a": w14[state_dim:].astype(jnp.bfloat16),   # [A, 512]
        "b14": jnp.concatenate([params["b1"], params["b4"]], axis=1).astype(jnp.float32),
        "w2": jnp.asarray(params["w2"], jnp.bfloat16),
        "b2": jnp.asarray(params["b2"], jnp.float32),
        "w5": jnp.asarray(params["w5"], jnp.bfloat16),
        "b5": jnp.asarray(params["b5"], jnp.float32),
        "w3p": w3p.astype(jnp.bfloat16),                 # [256, 2]
        "w6p": w6p.astype(jnp.bfloat16),                 # [256, 2]
        "b36": jnp.concatenate([params["b3"], params["b6"]], axis=1).astype(jnp.float32),
    }
    return jax.tree_util.tree_map(jnp.asarray, prep)


@jax.jit
def critic_forward(state, action, prep):
    """Equivalent of Critic.forward(state, action) -> (q1, q2)."""
    B, Sd = state.shape
    Ad = action.shape[1]

    # Batch tile: small batches -> one grid step; large batches -> 512-row
    # tiles sharded across TensorCores (v7x megacore) and well under the
    # scoped-VMEM default on every generation.
    TILE_B = min(512, _round_up(B, 8))
    Bp = _round_up(B, TILE_B)

    state_p = state.astype(jnp.float32)
    action_p = action.astype(jnp.float32)
    if Bp != B:
        state_p = jnp.pad(state_p, ((0, Bp - B), (0, 0)))
        action_p = jnp.pad(action_p, ((0, Bp - B), (0, 0)))

    batch_map = lambda i: (i, 0)
    const_map = lambda i: (0, 0)

    q = pl.pallas_call(
        _critic_kernel,
        out_shape=jax.ShapeDtypeStruct((Bp, 2), jnp.float32),
        grid=(Bp // TILE_B,),
        in_specs=[
            pl.BlockSpec((TILE_B, Sd), batch_map),
            pl.BlockSpec((TILE_B, Ad), batch_map),
            pl.BlockSpec(prep["w14_s"].shape, const_map),
            pl.BlockSpec(prep["w14_a"].shape, const_map),
            pl.BlockSpec(prep["b14"].shape, const_map),
            pl.BlockSpec(prep["w2"].shape, const_map),
            pl.BlockSpec(prep["b2"].shape, const_map),
            pl.BlockSpec(prep["w5"].shape, const_map),
            pl.BlockSpec(prep["b5"].shape, const_map),
            pl.BlockSpec(prep["w3p"].shape, const_map),
            pl.BlockSpec(prep["w6p"].shape, const_map),
            pl.BlockSpec(prep["b36"].shape, const_map),
        ],
        out_specs=pl.BlockSpec((TILE_B, 2), batch_map),
        compiler_params=pltpu.CompilerParams(
            dimension_semantics=("parallel",)),
    )(state_p, action_p,
      prep["w14_s"], prep["w14_a"], prep["b14"],
      prep["w2"], prep["b2"], prep["w5"], prep["b5"],
      prep["w3p"], prep["w6p"], prep["b36"])

    return q[:B, 0:1], q[:B, 1:2]


def init_params(key, state_dim, action_dim):
    """Deterministic synthetic parameters (shapes match Critic.__init__)."""
    in_dim = state_dim + action_dim
    shapes = {
        "w1": (in_dim, HIDDEN), "b1": (1, HIDDEN),
        "w2": (HIDDEN, HIDDEN), "b2": (1, HIDDEN),
        "w3": (HIDDEN, 1),      "b3": (1, 1),
        "w4": (in_dim, HIDDEN), "b4": (1, HIDDEN),
        "w5": (HIDDEN, HIDDEN), "b5": (1, HIDDEN),
        "w6": (HIDDEN, 1),      "b6": (1, 1),
    }
    params = {}
    keys = jax.random.split(key, len(shapes))
    for k, (name, shp) in zip(keys, sorted(shapes.items())):
        fan_in = shp[0] if name.startswith("w") else HIDDEN
        scale = 1.0 / jnp.sqrt(jnp.float32(fan_in))
        params[name] = jax.random.uniform(k, shp, jnp.float32, -1.0, 1.0) * scale
    return params


def reference_forward_f32(state, action, p):
    sa = jnp.concatenate([state, action], axis=1).astype(jnp.float32)
    h = jnp.maximum(sa @ p["w1"] + p["b1"], 0.0)
    h = jnp.maximum(h @ p["w2"] + p["b2"], 0.0)
    q1 = h @ p["w3"] + p["b3"]
    g = jnp.maximum(sa @ p["w4"] + p["b4"], 0.0)
    g = jnp.maximum(g @ p["w5"] + p["b5"], 0.0)
    q2 = g @ p["w6"] + p["b6"]
    return q1, q2


def reference_forward_bf16(state, action, p):
    """Mirrors the kernel's bf16-weight / f32-accumulate scheme."""
    bf = lambda x: x.astype(jnp.bfloat16)
    dot = lambda x, w: jnp.dot(bf(x), bf(w), preferred_element_type=jnp.float32)
    sa = jnp.concatenate([state, action], axis=1).astype(jnp.float32)
    h = jnp.maximum(dot(sa, p["w1"]) + p["b1"], 0.0)
    h = jnp.maximum(dot(h, p["w2"]) + p["b2"], 0.0)
    q1 = dot(h, p["w3"]) + p["b3"]
    g = jnp.maximum(dot(sa, p["w4"]) + p["b4"], 0.0)
    g = jnp.maximum(dot(g, p["w5"]) + p["b5"], 0.0)
    q2 = dot(g, p["w6"]) + p["b6"]
    return q1, q2


if __name__ == "__main__":
    key = jax.random.PRNGKey(0)
    k_s, k_a, k_p = jax.random.split(key, 3)

    batch, state_dim, action_dim = 2, 16, 8
    state = jax.random.normal(k_s, (batch, state_dim), jnp.float32)
    action = jax.random.normal(k_a, (batch, action_dim), jnp.float32)
    params = init_params(k_p, state_dim, action_dim)

    prep = prepare_params(params, state_dim)          # one-time weight prep

    q1, q2 = critic_forward(state, action, prep)
    q1, q2 = jax.block_until_ready((q1, q2))

    assert q1.shape == (batch, 1) and q2.shape == (batch, 1)

    # Tight check against a bf16-matched reference (same numerics as kernel).
    r1b, r2b = reference_forward_bf16(state, action, params)
    assert jnp.allclose(q1, r1b, atol=2e-3, rtol=2e-3)
    assert jnp.allclose(q2, r2b, atol=2e-3, rtol=2e-3)

    # Looser sanity check against the exact f32 semantics of the module.
    r1, r2 = reference_forward_f32(state, action, params)
    assert jnp.allclose(q1, r1, atol=5e-2, rtol=5e-2)
    assert jnp.allclose(q2, r2, atol=5e-2, rtol=5e-2)

    print("KERNEL_OK")
</pallas_src>

<mosaic_0001>
module attributes {stable_mosaic.version = 11 : i64} {
  func.func @_critic_kernel(%arg0: i32, %arg1: memref<8x16xf32, #tpu.memory_space<vmem>>, %arg2: memref<8x8xf32, #tpu.memory_space<vmem>>, %arg3: memref<16x512xbf16, #tpu.memory_space<vmem>>, %arg4: memref<8x512xbf16, #tpu.memory_space<vmem>>, %arg5: memref<1x512xf32, #tpu.memory_space<vmem>>, %arg6: memref<256x256xbf16, #tpu.memory_space<vmem>>, %arg7: memref<1x256xf32, #tpu.memory_space<vmem>>, %arg8: memref<256x256xbf16, #tpu.memory_space<vmem>>, %arg9: memref<1x256xf32, #tpu.memory_space<vmem>>, %arg10: memref<256x2xbf16, #tpu.memory_space<vmem>>, %arg11: memref<256x2xbf16, #tpu.memory_space<vmem>>, %arg12: memref<1x2xf32, #tpu.memory_space<vmem>>, %arg13: memref<8x2xf32, #tpu.memory_space<vmem>>) attributes {dimension_semantics = [#tpu.dimension_semantics<parallel>], iteration_bounds = array<i64: 1>, scalar_prefetch = 0 : i64, scratch_operands = 0 : i64, tpu.core_type = #tpu.core_type<tc>, window_params = [{transform_indices = @transform_0, window_bounds = array<i64: 8, 16>}, {transform_indices = @transform_1, window_bounds = array<i64: 8, 8>}, {pipeline_mode = #tpu.pipeline_mode<synchronous>, transform_indices = @transform_2, window_bounds = array<i64: 16, 512>}, {pipeline_mode = #tpu.pipeline_mode<synchronous>, transform_indices = @transform_3, window_bounds = array<i64: 8, 512>}, {pipeline_mode = #tpu.pipeline_mode<synchronous>, transform_indices = @transform_4, window_bounds = array<i64: 1, 512>}, {pipeline_mode = #tpu.pipeline_mode<synchronous>, transform_indices = @transform_5, window_bounds = array<i64: 256, 256>}, {pipeline_mode = #tpu.pipeline_mode<synchronous>, transform_indices = @transform_6, window_bounds = array<i64: 1, 256>}, {pipeline_mode = #tpu.pipeline_mode<synchronous>, transform_indices = @transform_7, window_bounds = array<i64: 256, 256>}, {pipeline_mode = #tpu.pipeline_mode<synchronous>, transform_indices = @transform_8, window_bounds = array<i64: 1, 256>}, {pipeline_mode = #tpu.pipeline_mode<synchronous>, transform_indices = @transform_9, window_bounds = array<i64: 256, 2>}, {pipeline_mode = #tpu.pipeline_mode<synchronous>, transform_indices = @transform_10, window_bounds = array<i64: 256, 2>}, {pipeline_mode = #tpu.pipeline_mode<synchronous>, transform_indices = @transform_11, window_bounds = array<i64: 1, 2>}, {transform_indices = @transform_12, window_bounds = array<i64: 8, 2>}]} {
    %c0 = arith.constant 0 : index
    %c0_0 = arith.constant 0 : index
    %0 = vector.load %arg1[%c0, %c0_0] : memref<8x16xf32, #tpu.memory_space<vmem>>, vector<8x16xf32>
    %1 = arith.truncf %0 : vector<8x16xf32> to vector<8x16xbf16>
    %c0_1 = arith.constant 0 : index
    %c0_2 = arith.constant 0 : index
    %2 = vector.load %arg2[%c0_1, %c0_2] : memref<8x8xf32, #tpu.memory_space<vmem>>, vector<8x8xf32>
    %3 = arith.truncf %2 : vector<8x8xf32> to vector<8x8xbf16>
    %c0_3 = arith.constant 0 : index
    %c0_4 = arith.constant 0 : index
    %4 = vector.load %arg3[%c0_3, %c0_4] : memref<16x512xbf16, #tpu.memory_space<vmem>>, vector<16x512xbf16>
    %cst = arith.constant dense<0.000000e+00> : vector<8x512xf32>
    %5 = tpu.matmul %1, %4, %cst {dimension_numbers = #tpu.dot_dimension_numbers<[1], [0], [0], [1], [0, 0, 1, 1], [], []>} : vector<8x16xbf16>, vector<16x512xbf16>, vector<8x512xf32> -> vector<8x512xf32>
    %c0_5 = arith.constant 0 : index
    %c0_6 = arith.constant 0 : index
    %6 = vector.load %arg4[%c0_5, %c0_6] : memref<8x512xbf16, #tpu.memory_space<vmem>>, vector<8x512xbf16>
    %cst_7 = arith.constant dense<0.000000e+00> : vector<8x512xf32>
    %7 = tpu.matmul %3, %6, %cst_7 {dimension_numbers = #tpu.dot_dimension_numbers<[1], [0], [0], [1], [0, 0, 1, 1], [], []>} : vector<8x8xbf16>, vector<8x512xbf16>, vector<8x512xf32> -> vector<8x512xf32>
    %8 = arith.addf %5, %7 : vector<8x512xf32>
    %c0_8 = arith.constant 0 : index
    %c0_9 = arith.constant 0 : index
    %9 = vector.load %arg5[%c0_8, %c0_9] : memref<1x512xf32, #tpu.memory_space<vmem>>, vector<1x512xf32>
    %10 = vector.broadcast %9 : vector<1x512xf32> to vector<8x512xf32>
    %11 = arith.addf %8, %10 : vector<8x512xf32>
    %cst_10 = arith.constant 0.000000e+00 : f32
    %12 = vector.broadcast %cst_10 : f32 to vector<8x512xf32>
    %13 = arith.maximumf %11, %12 : vector<8x512xf32>
    %14 = vector.extract_strided_slice %13 {offsets = [0, 0], sizes = [8, 256], strides = [1, 1]} : vector<8x512xf32> to vector<8x256xf32>
    %15 = arith.truncf %14 : vector<8x256xf32> to vector<8x256xbf16>
    %16 = vector.extract_strided_slice %13 {offsets = [0, 256], sizes = [8, 256], strides = [1, 1]} : vector<8x512xf32> to vector<8x256xf32>
    %17 = arith.truncf %16 : vector<8x256xf32> to vector<8x256xbf16>
    %c0_11 = arith.constant 0 : index
    %c0_12 = arith.constant 0 : index
    %18 = vector.load %arg6[%c0_11, %c0_12] : memref<256x256xbf16, #tpu.memory_space<vmem>>, vector<256x256xbf16>
    %cst_13 = arith.constant dense<0.000000e+00> : vector<8x256xf32>
    %19 = tpu.matmul %15, %18, %cst_13 {dimension_numbers = #tpu.dot_dimension_numbers<[1], [0], [0], [1], [0, 0, 1, 1], [], []>} : vector<8x256xbf16>, vector<256x256xbf16>, vector<8x256xf32> -> vector<8x256xf32>
    %c0_14 = arith.constant 0 : index
    %c0_15 = arith.constant 0 : index
    %20 = vector.load %arg7[%c0_14, %c0_15] : memref<1x256xf32, #tpu.memory_space<vmem>>, vector<1x256xf32>
    %21 = vector.broadcast %20 : vector<1x256xf32> to vector<8x256xf32>
    %22 = arith.addf %19, %21 : vector<8x256xf32>
    %cst_16 = arith.constant 0.000000e+00 : f32
    %23 = vector.broadcast %cst_16 : f32 to vector<8x256xf32>
    %24 = arith.maximumf %22, %23 : vector<8x256xf32>
    %c0_17 = arith.constant 0 : index
    %c0_18 = arith.constant 0 : index
    %25 = vector.load %arg8[%c0_17, %c0_18] : memref<256x256xbf16, #tpu.memory_space<vmem>>, vector<256x256xbf16>
    %cst_19 = arith.constant dense<0.000000e+00> : vector<8x256xf32>
    %26 = tpu.matmul %17, %25, %cst_19 {dimension_numbers = #tpu.dot_dimension_numbers<[1], [0], [0], [1], [0, 0, 1, 1], [], []>} : vector<8x256xbf16>, vector<256x256xbf16>, vector<8x256xf32> -> vector<8x256xf32>
    %c0_20 = arith.constant 0 : index
    %c0_21 = arith.constant 0 : index
    %27 = vector.load %arg9[%c0_20, %c0_21] : memref<1x256xf32, #tpu.memory_space<vmem>>, vector<1x256xf32>
    %28 = vector.broadcast %27 : vector<1x256xf32> to vector<8x256xf32>
    %29 = arith.addf %26, %28 : vector<8x256xf32>
    %cst_22 = arith.constant 0.000000e+00 : f32
    %30 = vector.broadcast %cst_22 : f32 to vector<8x256xf32>
    %31 = arith.maximumf %29, %30 : vector<8x256xf32>
    %32 = arith.truncf %24 : vector<8x256xf32> to vector<8x256xbf16>
    %c0_23 = arith.constant 0 : index
    %c0_24 = arith.constant 0 : index
    %33 = vector.load %arg10[%c0_23, %c0_24] : memref<256x2xbf16, #tpu.memory_space<vmem>>, vector<256x2xbf16>
    %cst_25 = arith.constant dense<0.000000e+00> : vector<8x2xf32>
    %34 = tpu.matmul %32, %33, %cst_25 {dimension_numbers = #tpu.dot_dimension_numbers<[1], [0], [0], [1], [0, 0, 1, 1], [], []>} : vector<8x256xbf16>, vector<256x2xbf16>, vector<8x2xf32> -> vector<8x2xf32>
    %35 = arith.truncf %31 : vector<8x256xf32> to vector<8x256xbf16>
    %c0_26 = arith.constant 0 : index
    %c0_27 = arith.constant 0 : index
    %36 = vector.load %arg11[%c0_26, %c0_27] : memref<256x2xbf16, #tpu.memory_space<vmem>>, vector<256x2xbf16>
    %cst_28 = arith.constant dense<0.000000e+00> : vector<8x2xf32>
    %37 = tpu.matmul %35, %36, %cst_28 {dimension_numbers = #tpu.dot_dimension_numbers<[1], [0], [0], [1], [0, 0, 1, 1], [], []>} : vector<8x256xbf16>, vector<256x2xbf16>, vector<8x2xf32> -> vector<8x2xf32>
    %38 = arith.addf %34, %37 : vector<8x2xf32>
    %c0_29 = arith.constant 0 : index
    %c0_30 = arith.constant 0 : index
    %39 = vector.load %arg12[%c0_29, %c0_30] : memref<1x2xf32, #tpu.memory_space<vmem>>, vector<1x2xf32>
    %40 = vector.broadcast %39 : vector<1x2xf32> to vector<8x2xf32>
    %41 = arith.addf %38, %40 : vector<8x2xf32>
    %c0_31 = arith.constant 0 : index
    %c0_32 = arith.constant 0 : index
    %42 = vector.load %arg13[%c0_31, %c0_32] : memref<8x2xf32, #tpu.memory_space<vmem>>, vector<8x2xf32>
    tpu.vector_store %arg13[%c0_31, %c0_32], %41 {strides = array<i32>} : memref<8x2xf32, #tpu.memory_space<vmem>>, vector<8x2xf32>,
    return
  }
  func.func @transform_0(%arg0: i32) -> (i32, i32) {
    %c0_i32 = arith.constant 0 : i32
    %c0_i32_0 = arith.constant 0 : i32
    return %arg0, %c0_i32 : i32, i32
  }
  func.func @transform_1(%arg0: i32) -> (i32, i32) {
    %c0_i32 = arith.constant 0 : i32
    %c0_i32_0 = arith.constant 0 : i32
    return %arg0, %c0_i32 : i32, i32
  }
  func.func @transform_2(%arg0: i32) -> (i32, i32) {
    %c0_i32 = arith.constant 0 : i32
    %c0_i32_0 = arith.constant 0 : i32
    %c0_i32_1 = arith.constant 0 : i32
    return %c0_i32, %c0_i32_0 : i32, i32
  }
  func.func @transform_3(%arg0: i32) -> (i32, i32) {
    %c0_i32 = arith.constant 0 : i32
    %c0_i32_0 = arith.constant 0 : i32
    %c0_i32_1 = arith.constant 0 : i32
    return %c0_i32, %c0_i32_0 : i32, i32
  }
  func.func @transform_4(%arg0: i32) -> (i32, i32) {
    %c0_i32 = arith.constant 0 : i32
    %c0_i32_0 = arith.constant 0 : i32
    %c0_i32_1 = arith.constant 0 : i32
    return %c0_i32, %c0_i32_0 : i32, i32
  }
  func.func @transform_5(%arg0: i32) -> (i32, i32) {
    %c0_i32 = arith.constant 0 : i32
    %c0_i32_0 = arith.constant 0 : i32
    %c0_i32_1 = arith.constant 0 : i32
    return %c0_i32, %c0_i32_0 : i32, i32
  }
  func.func @transform_6(%arg0: i32) -> (i32, i32) {
    %c0_i32 = arith.constant 0 : i32
    %c0_i32_0 = arith.constant 0 : i32
    %c0_i32_1 = arith.constant 0 : i32
    return %c0_i32, %c0_i32_0 : i32, i32
  }
  func.func @transform_7(%arg0: i32) -> (i32, i32) {
    %c0_i32 = arith.constant 0 : i32
    %c0_i32_0 = arith.constant 0 : i32
    %c0_i32_1 = arith.constant 0 : i32
    return %c0_i32, %c0_i32_0 : i32, i32
  }
  func.func @transform_8(%arg0: i32) -> (i32, i32) {
    %c0_i32 = arith.constant 0 : i32
    %c0_i32_0 = arith.constant 0 : i32
    %c0_i32_1 = arith.constant 0 : i32
    return %c0_i32, %c0_i32_0 : i32, i32
  }
  func.func @transform_9(%arg0: i32) -> (i32, i32) {
    %c0_i32 = arith.constant 0 : i32
    %c0_i32_0 = arith.constant 0 : i32
    %c0_i32_1 = arith.constant 0 : i32
    return %c0_i32, %c0_i32_0 : i32, i32
  }
  func.func @transform_10(%arg0: i32) -> (i32, i32) {
    %c0_i32 = arith.constant 0 : i32
    %c0_i32_0 = arith.constant 0 : i32
    %c0_i32_1 = arith.constant 0 : i32
    return %c0_i32, %c0_i32_0 : i32, i32
  }
  func.func @transform_11(%arg0: i32) -> (i32, i32) {
    %c0_i32 = arith.constant 0 : i32
    %c0_i32_0 = arith.constant 0 : i32
    %c0_i32_1 = arith.constant 0 : i32
    return %c0_i32, %c0_i32_0 : i32, i32
  }
  func.func @transform_12(%arg0: i32) -> (i32, i32) {
    %c0_i32 = arith.constant 0 : i32
    %c0_i32_0 = arith.constant 0 : i32
    return %arg0, %c0_i32 : i32, i32
  }
}

</mosaic_0001>

<llo_original>
// kernel: critic_forward.1
$region0: #{critic_forward.1}
  #allocation0 [shape = 'u32[]', space=smem, size = 0x4, offset = 0x4, fixed_abs, tag = 'smem constant byte address 0x4 - core index']
  #allocation1 [shape = 'u32[144,128]{1,0:T(1,128)}', space=vmem, size = 0x12000, scoped, tag = 'internal scratch']
  %s0 = inlined_call_operand.vmem [shape: f32[8,16], index: 0, kind: input, shape index: {}]
  %s1 = inlined_call_operand.vmem [shape: f32[8,8], index: 1, kind: input, shape index: {}]
  %s2 = inlined_call_operand.vmem [shape: bf16[16,512], index: 2, kind: input, shape index: {}]
  %s3 = inlined_call_operand.hbm [shape: bf16[8,512], index: 3, kind: input, shape index: {}]
  %s4 = inlined_call_operand.vmem [shape: f32[1,512], index: 4, kind: input, shape index: {}]
  %s5 = inlined_call_operand.vmem [shape: bf16[256,256], index: 5, kind: input, shape index: {}]
  %s6 = inlined_call_operand.vmem [shape: f32[1,256], index: 6, kind: input, shape index: {}]
  %s7 = inlined_call_operand.hbm [shape: bf16[256,256], index: 7, kind: input, shape index: {}]
  %s8 = inlined_call_operand.hbm [shape: f32[1,256], index: 8, kind: input, shape index: {}]
  %s9 = inlined_call_operand.vmem [shape: bf16[256,2], index: 9, kind: input, shape index: {}]
  %s10 = inlined_call_operand.vmem [shape: bf16[256,2], index: 10, kind: input, shape index: {}]
  %s11 = inlined_call_operand.hbm [shape: f32[1,2], index: 11, kind: input, shape index: {}]
  %s12 = inlined_call_operand.vmem [shape: f32[8,2], index: 12, kind: output, shape index: {}]
  %s13 = sld [smem:[#allocation0]]
  $region74: #{critic_forward.1} parent=0
    _
  %s15 = ssub.s32 1, %s13
  %s16 = scalar_select 0, %s15, %s13
  $region1: #{critic_forward.1} parent=0
    #allocation2 [shape = 'u8[8192]{0}', space=vmem, size = 0x2000, scoped, tag = 'input window, operand 3, single buffered']
    #allocation3 [shape = 's32[1]{0}', space=sflag, size = 0x4, scoped, tag = 'scoped memory for critic_forward.1']
    #allocation4 [shape = 'u8[131072]{0}', space=vmem, size = 0x20000, scoped, tag = 'input window, operand 7, single buffered']
    #allocation5 [shape = 's32[1]{0}', space=sflag, size = 0x4, scoped, tag = 'scoped memory for critic_forward.1']
    #allocation6 [shape = 'u8[1024]{0}', space=vmem, size = 0x400, scoped, tag = 'input window, operand 8, single buffered']
    #allocation7 [shape = 'u8[512]{0}', space=vmem, size = 0x400, scoped, tag = 'input window, operand 11, single buffered']
    #allocation8 [shape = 's32[1]{0}', space=sflag, size = 0x4, scoped, tag = 'scoped memory for critic_forward.1']
    %17 = vsyncpa [#allocation3], 0
    %18 = vsyncpa [#allocation5], 0
    %19 = vsyncpa [#allocation8], 0
    // Predicated region
    $region2: #{critic_forward.1} parent=1 // pred_check
      _
    $region3: #{critic_forward.1} parent=1 // pred_check_branch
      %21 = sbr.rel (0) target = $region5
    $region4: #{critic_forward.1} parent=1 // pred_region
      _
    $region5: #{critic_forward.1} parent=1 // pred_fallthru
      _
    // Predicated region
    $region6: #{critic_forward.1} parent=1 // pred_check
      _
    $region7: #{critic_forward.1} parent=1 // pred_check_branch
      %23 = sbr.rel (0) target = $region9
    $region8: #{critic_forward.1} parent=1 // pred_region
      _
    $region9: #{critic_forward.1} parent=1 // pred_fallthru
      _
    // Predicated region
    $region10: #{critic_forward.1} parent=1 // pred_check
      _
    $region11: #{critic_forward.1} parent=1 // pred_check_branch
      %25 = sbr.rel (0) target = $region13
    $region12: #{critic_forward.1} parent=1 // pred_region
      _
    $region13: #{critic_forward.1} parent=1 // pred_fallthru
      _
    // Predicated region
    $region14: #{critic_forward.1} parent=1 // pred_check
      _
    $region15: #{critic_forward.1} parent=1 // pred_check_branch
      %27 = sbr.rel (0) target = $region17
    $region16: #{critic_forward.1} parent=1 // pred_region
      %s29 = ssub.s32 256, 256
      %30 = vsyncadd [#allocation3], %s29
      %s32 = sshll.u32 [#allocation2], 4
      %s33 = int_to_ptr.vmem [resolvable:$true] %s32
      %35 = dma.hbm_to_vmem [thread:$0]  %s3, 256, %s33, [#allocation3]
    $region17: #{critic_forward.1} parent=1 // pred_fallthru
      _
    // Predicated region
    $region18: #{critic_forward.1} parent=1 // pred_check
      _
    $region19: #{critic_forward.1} parent=1 // pred_check_branch
      %37 = sbr.rel (0) target = $region21
    $region20: #{critic_forward.1} parent=1 // pred_region
      _
    $region21: #{critic_forward.1} parent=1 // pred_fallthru
      _
    // Predicated region
    $region22: #{critic_forward.1} parent=1 // pred_check
      _
    $region23: #{critic_forward.1} parent=1 // pred_check_branch
      %39 = sbr.rel (0) target = $region25
    $region24: #{critic_forward.1} parent=1 // pred_region
      _
    $region25: #{critic_forward.1} parent=1 // pred_fallthru
      _
    // Predicated region
    $region26: #{critic_forward.1} parent=1 // pred_check
      _
    $region27: #{critic_forward.1} parent=1 // pred_check_branch
      %41 = sbr.rel (0) target = $region29
    $region28: #{critic_forward.1} parent=1 // pred_region
      _
    $region29: #{critic_forward.1} parent=1 // pred_fallthru
      _
    // Predicated region
    $region30: #{critic_forward.1} parent=1 // pred_check
      _
    $region31: #{critic_forward.1} parent=1 // pred_check_branch
      %43 = sbr.rel (0) target = $region33
    $region32: #{critic_forward.1} parent=1 // pred_region
      %s45 = ssub.s32 4096, 4096
      %46 = vsyncadd [#allocation5], %s45
      %s47 = sshll.u32 [#allocation4], 4
      %s48 = int_to_ptr.vmem [resolvable:$true] %s47
      %53 = dma.hbm_to_vmem [thread:$0]  %s7, 4096, %s48, [#allocation5], 128, 128, 8
    $region33: #{critic_forward.1} parent=1 // pred_fallthru
      _
    // Predicated region
    $region34: #{critic_forward.1} parent=1 // pred_check
      _
    $region35: #{critic_forward.1} parent=1 // pred_check_branch
      %55 = sbr.rel (0) target = $region37
    $region36: #{critic_forward.1} parent=1 // pred_region
      %s57 = ssub.s32 32, 32
      %58 = vsyncadd [#allocation5], %s57
      %s60 = sshll.u32 [#allocation6], 4
      %s61 = int_to_ptr.vmem [resolvable:$true] %s60
      %63 = dma.hbm_to_vmem [thread:$0]  %s8, 32, %s61, [#allocation5]
    $region37: #{critic_forward.1} parent=1 // pred_fallthru
      _
    // Predicated region
    $region38: #{critic_forward.1} parent=1 // pred_check
      _
    $region39: #{critic_forward.1} parent=1 // pred_check_branch
      %65 = sbr.rel (0) target = $region41
    $region40: #{critic_forward.1} parent=1 // pred_region
      _
    $region41: #{critic_forward.1} parent=1 // pred_fallthru
      _
    // Predicated region
    $region42: #{critic_forward.1} parent=1 // pred_check
      _
    $region43: #{critic_forward.1} parent=1 // pred_check_branch
      %67 = sbr.rel (0) target = $region45
    $region44: #{critic_forward.1} parent=1 // pred_region
      _
    $region45: #{critic_forward.1} parent=1 // pred_fallthru
      _
    // Predicated region
    $region46: #{critic_forward.1} parent=1 // pred_check
      _
    $region47: #{critic_forward.1} parent=1 // pred_check_branch
      %69 = sbr.rel (0) target = $region49
    $region48: #{critic_forward.1} parent=1 // pred_region
      %s71 = ssub.s32 16, 16
      %72 = vsyncadd [#allocation8], %s71
      %s74 = sshll.u32 [#allocation7], 4
      %s75 = int_to_ptr.vmem [resolvable:$true] %s74
      %77 = dma.hbm_to_vmem [thread:$0]  %s11, 16, %s75, [#allocation8]
    $region49: #{critic_forward.1} parent=1 // pred_fallthru
      _
    // Predicated region
    $region50: #{critic_forward.1} parent=1 // pred_check
      _
    $region51: #{critic_forward.1} parent=1 // pred_check_branch
      %79 = sbr.rel (0) target = $region53
    $region52: #{critic_forward.1} parent=1 // pred_region
      %80 = dma.done [#allocation3], 256
    $region53: #{critic_forward.1} parent=1 // pred_fallthru
      _
    // Predicated region
    $region54: #{critic_forward.1} parent=1 // pred_check
      _
    $region55: #{critic_forward.1} parent=1 // pred_check_branch
      %82 = sbr.rel (0) target = $region57
    $region56: #{critic_forward.1} parent=1 // pred_region
      %83 = dma.done [#allocation5], 4096
    $region57: #{critic_forward.1} parent=1 // pred_fallthru
      _
    // Predicated region
    $region58: #{critic_forward.1} parent=1 // pred_check
      _
    $region59: #{critic_forward.1} parent=1 // pred_check_branch
      %85 = sbr.rel (0) target = $region61
    $region60: #{critic_forward.1} parent=1 // pred_region
      %86 = dma.done [#allocation5], 32
    $region61: #{critic_forward.1} parent=1 // pred_fallthru
      _
    // Predicated region
    $region62: #{critic_forward.1} parent=1 // pred_check
      _
    $region63: #{critic_forward.1} parent=1 // pred_check_branch
      %88 = sbr.rel (0) target = $region65
    $region64: #{critic_forward.1} parent=1 // pred_region
      %89 = dma.done [#allocation8], 16
    $region65: #{critic_forward.1} parent=1 // pred_fallthru
      _
    %v91 = vld [vmem:[%s0] sm:$0xff]
    %v92 = vpack.c.bf16 %v91, %v91
    %v93 = vld [vmem:[%s1] sm:$0xff]
    %v94 = vpack.c.bf16 %v93, %v93
    %v95 = vld [vmem:[%s2] sm:$0xff]
    %v96 = vld [vmem:[%s2 + $0x8] sm:$0xff]
    %v97 = vld [vmem:[%s2 + $0x10] sm:$0xff]
    %v98 = vld [vmem:[%s2 + $0x18] sm:$0xff]
    %v99 = vld [vmem:[#allocation2] sm:$0xff]
    %v100 = vld [vmem:[#allocation2 + $0x8] sm:$0xff]
    %v103 = vunpack.c.l.b16 %v99
    %v104 = vunpack.c.h.b16 %v99
    %v105 = vunpack.c.l.b16 %v100
    %v106 = vunpack.c.h.b16 %v100
    %v107 = vpack.c.b16 %v103, %v103
    %v108 = vpack.c.b16 %v104, %v104
    %v109 = vpack.c.b16 %v105, %v105
    %v110 = vpack.c.b16 %v106, %v106
    %vm111 = vcmask 64512
    %v113 = vsel %vm111, %v94, 0
    %vm115 = vcmask 1043456
    %v117 = vsel %vm115, %v107, 0
    %v120 = vsel %vm115, %v108, 0
    %v123 = vsel %vm115, %v109, 0
    %v126 = vsel %vm115, %v110, 0
    %128 = vmatprep.subr.bf16.mxu0 0
    %129 = vmatpush1.bf16.msra.mxu0 0
    %130 = vmatprep.subr.bf16.mxu0 0
    %131 = vmatpush1.bf16.msra.mxu0 0
    %132 = vmatprep.subr.bf16.mxu0 0
    %133 = vmatpush1.bf16.msra.mxu0 0
    %134 = vmatprep.subr.bf16.mxu0 0
    %135 = vmatpush1.bf16.msra.mxu0 0
    %136 = vmatprep.subr.bf16.mxu0 0
    %137 = vmatpush1.bf16.msra.mxu0 0
    %138 = vmatprep.subr.bf16.mxu0 0
    %139 = vmatpush1.bf16.msra.mxu0 0
    %140 = vmatprep.subr.bf16.mxu0 0
    %141 = vmatpush1.bf16.msra.mxu0 0
    %142 = vmatprep.subr.bf16.mxu0 %v120
    %143 = vmatpush1.bf16.msra.mxu0 %v117
    %144 = vmatprep.subr.bf16.mxu0 0
    %145 = vmatpush2.bf16.msra.mxu0 0
    %146 = vmatprep.subr.bf16.mxu0 0
    %147 = vmatpush2.bf16.msra.mxu0 0
    %148 = vmatprep.subr.bf16.mxu0 0
    %149 = vmatpush2.bf16.msra.mxu0 0
    %150 = vmatprep.subr.bf16.mxu0 0
    %151 = vmatpush2.bf16.msra.mxu0 0
    %152 = vmatprep.subr.bf16.mxu0 0
    %153 = vmatpush2.bf16.msra.mxu0 0
    %154 = vmatprep.subr.bf16.mxu0 0
    %155 = vmatpush2.bf16.msra.mxu0 0
    %156 = vmatprep.subr.bf16.mxu0 0
    %157 = vmatpush2.bf16.msra.mxu0 0
    %158 = vmatprep.subr.bf16.mxu0 0
    %159 = vmatpush2.bf16.msra.mxu0 0
    %160 = vmatprep.mubr.bf16.mxu0 0
    %161 = vmatmul.mubr.bf16.gmra.mxu0 %v113
    %v162 = vpop.f32.mrf.mxu0
    %v163 = vadd.f32 0.0, %v162
    %v164 = vpop.f32.mrf.mxu0
    %v165 = vadd.f32 0.0, %v164
    %v166 = vpop.f32.mrf.mxu0
    %v167 = vpop.f32.mrf.mxu0
    %168 = vdwg.mxu0
    %169 = vmatprep.subr.bf16.mxu0 0
    %170 = vmatpush1.bf16.msra.mxu0 0
    %171 = vmatprep.subr.bf16.mxu0 0
    %172 = vmatpush1.bf16.msra.mxu0 0
    %173 = vmatprep.subr.bf16.mxu0 0
    %174 = vmatpush1.bf16.msra.mxu0 0
    %175 = vmatprep.subr.bf16.mxu0 0
    %176 = vmatpush1.bf16.msra.mxu0 0
    %177 = vmatprep.subr.bf16.mxu0 0
    %178 = vmatpush1.bf16.msra.mxu0 0
    %179 = vmatprep.subr.bf16.mxu0 0
    %180 = vmatpush1.bf16.msra.mxu0 0
    %181 = vmatprep.subr.bf16.mxu0 0
    %182 = vmatpush1.bf16.msra.mxu0 0
    %183 = vmatprep.subr.bf16.mxu0 %v126
    %184 = vmatpush1.bf16.msra.mxu0 %v123
    %185 = vmatprep.subr.bf16.mxu0 0
    %186 = vmatpush2.bf16.msra.mxu0 0
    %187 = vmatprep.subr.bf16.mxu0 0
    %188 = vmatpush2.bf16.msra.mxu0 0
    %189 = vmatprep.subr.bf16.mxu0 0
    %190 = vmatpush2.bf16.msra.mxu0 0
    %191 = vmatprep.subr.bf16.mxu0 0
    %192 = vmatpush2.bf16.msra.mxu0 0
    %193 = vmatprep.subr.bf16.mxu0 0
    %194 = vmatpush2.bf16.msra.mxu0 0
    %195 = vmatprep.subr.bf16.mxu0 0
    %196 = vmatpush2.bf16.msra.mxu0 0
    %197 = vmatprep.subr.bf16.mxu0 0
    %198 = vmatpush2.bf16.msra.mxu0 0
    %199 = vmatprep.subr.bf16.mxu0 0
    %200 = vmatpush2.bf16.msra.mxu0 0
    %201 = vmatprep.mubr.bf16.mxu0 0
    %202 = vmatmul.mubr.bf16.gmra.mxu0 %v113
    %v203 = vpop.f32.mrf.mxu0
    %v204 = vadd.f32 0.0, %v203
    %v205 = vpop.f32.mrf.mxu0
    %v206 = vadd.f32 0.0, %v205
    %v207 = vpop.f32.mrf.mxu0
    %v208 = vpop.f32.mrf.mxu0
    %209 = vdwg.mxu0
    %v214 = vunpack.c.l.b16 %v95
    %v215 = vunpack.c.h.b16 %v95
    %v216 = vunpack.c.l.b16 %v96
    %v217 = vunpack.c.h.b16 %v96
    %v218 = vunpack.c.l.b16 %v97
    %v219 = vunpack.c.h.b16 %v97
    %v220 = vunpack.c.l.b16 %v98
    %v221 = vunpack.c.h.b16 %v98
    %v222 = vpack.c.b16 %v218, %v214
    %v223 = vpack.c.b16 %v219, %v215
    %v224 = vpack.c.b16 %v220, %v216
    %v225 = vpack.c.b16 %v221, %v217
    %vm230 = vcmask 130048
    %v232 = vsel %vm230, %v92, 0
    %234 = vmatprep.subr.bf16.mxu0 0
    %235 = vmatpush1.bf16.msra.mxu0 0
    %236 = vmatprep.subr.bf16.mxu0 0
    %237 = vmatpush1.bf16.msra.mxu0 0
    %238 = vmatprep.subr.bf16.mxu0 0
    %239 = vmatpush1.bf16.msra.mxu0 0
    %240 = vmatprep.subr.bf16.mxu0 0
    %241 = vmatpush1.bf16.msra.mxu0 0
    %242 = vmatprep.subr.bf16.mxu0 0
    %243 = vmatpush1.bf16.msra.mxu0 0
    %244 = vmatprep.subr.bf16.mxu0 0
    %245 = vmatpush1.bf16.msra.mxu0 0
    %246 = vmatprep.subr.bf16.mxu0 0
    %247 = vmatpush1.bf16.msra.mxu0 0
    %248 = vmatprep.subr.bf16.mxu0 %v223
    %249 = vmatpush1.bf16.msra.mxu0 %v222
    %250 = vmatprep.subr.bf16.mxu0 0
    %251 = vmatpush2.bf16.msra.mxu0 0
    %252 = vmatprep.subr.bf16.mxu0 0
    %253 = vmatpush2.bf16.msra.mxu0 0
    %254 = vmatprep.subr.bf16.mxu0 0
    %255 = vmatpush2.bf16.msra.mxu0 0
    %256 = vmatprep.subr.bf16.mxu0 0
    %257 = vmatpush2.bf16.msra.mxu0 0
    %258 = vmatprep.subr.bf16.mxu0 0
    %259 = vmatpush2.bf16.msra.mxu0 0
    %260 = vmatprep.subr.bf16.mxu0 0
    %261 = vmatpush2.bf16.msra.mxu0 0
    %262 = vmatprep.subr.bf16.mxu0 0
    %263 = vmatpush2.bf16.msra.mxu0 0
    %264 = vmatprep.subr.bf16.mxu0 0
    %265 = vmatpush2.bf16.msra.mxu0 0
    %266 = vmatprep.mubr.bf16.mxu0 0
    %267 = vmatmul.mubr.bf16.gmra.mxu0 %v232
    %v268 = vpop.f32.mrf.mxu0
    %v269 = vadd.f32 %v163, %v268
    %v270 = vpop.f32.mrf.mxu0
    %v271 = vadd.f32 %v165, %v270
    %v272 = vpop.f32.mrf.mxu0
    %v273 = vpop.f32.mrf.mxu0
    %274 = vdwg.mxu0
    %275 = vmatprep.subr.bf16.mxu0 0
    %276 = vmatpush1.bf16.msra.mxu0 0
    %277 = vmatprep.subr.bf16.mxu0 0
    %278 = vmatpush1.bf16.msra.mxu0 0
    %279 = vmatprep.subr.bf16.mxu0 0
    %280 = vmatpush1.bf16.msra.mxu0 0
    %281 = vmatprep.subr.bf16.mxu0 0
    %282 = vmatpush1.bf16.msra.mxu0 0
    %283 = vmatprep.subr.bf16.mxu0 0
    %284 = vmatpush1.bf16.msra.mxu0 0
    %285 = vmatprep.subr.bf16.mxu0 0
    %286 = vmatpush1.bf16.msra.mxu0 0
    %287 = vmatprep.subr.bf16.mxu0 0
    %288 = vmatpush1.bf16.msra.mxu0 0
    %289 = vmatprep.subr.bf16.mxu0 %v225
    %290 = vmatpush1.bf16.msra.mxu0 %v224
    %291 = vmatprep.subr.bf16.mxu0 0
    %292 = vmatpush2.bf16.msra.mxu0 0
    %293 = vmatprep.subr.bf16.mxu0 0
    %294 = vmatpush2.bf16.msra.mxu0 0
    %295 = vmatprep.subr.bf16.mxu0 0
    %296 = vmatpush2.bf16.msra.mxu0 0
    %297 = vmatprep.subr.bf16.mxu0 0
    %298 = vmatpush2.bf16.msra.mxu0 0
    %299 = vmatprep.subr.bf16.mxu0 0
    %300 = vmatpush2.bf16.msra.mxu0 0
    %301 = vmatprep.subr.bf16.mxu0 0
    %302 = vmatpush2.bf16.msra.mxu0 0
    %303 = vmatprep.subr.bf16.mxu0 0
    %304 = vmatpush2.bf16.msra.mxu0 0
    %305 = vmatprep.subr.bf16.mxu0 0
    %306 = vmatpush2.bf16.msra.mxu0 0
    %307 = vmatprep.mubr.bf16.mxu0 0
    %308 = vmatmul.mubr.bf16.gmra.mxu0 %v232
    %v309 = vpop.f32.mrf.mxu0
    %v310 = vadd.f32 %v204, %v309
    %v311 = vpop.f32.mrf.mxu0
    %v312 = vadd.f32 %v206, %v311
    %v313 = vpop.f32.mrf.mxu0
    %v314 = vpop.f32.mrf.mxu0
    %315 = vdwg.mxu0
    %v316 = vld [vmem:[%s4] sm:$0xf]
    %v318 = vlaneseq
    %v319 = vshrl.u32 %v318, 7
    %v320 = vsub.s32 0, %v319
    %v321 = vrot.slane %v316, %v320
    %v322 = vlaneseq
    %v323 = vshrl.u32 %v322, 7
    %v324 = vsub.s32 1, %v323
    %v325 = vrot.slane %v316, %v324
    %v326 = vlaneseq
    %v327 = vshrl.u32 %v326, 7
    %v328 = vsub.s32 2, %v327
    %v329 = vrot.slane %v316, %v328
    %v330 = vlaneseq
    %v331 = vshrl.u32 %v330, 7
    %v332 = vsub.s32 3, %v331
    %v333 = vrot.slane %v316, %v332
    %v338 = vadd.f32 %v269, %v321
    %v339 = vadd.f32 %v271, %v325
    %v340 = vadd.f32 %v310, %v329
    %v341 = vadd.f32 %v312, %v333
    %v342 = vmax.f32 %v338, 0.0
    %v343 = vmax.f32 %v339, 0.0
    %v344 = vmax.f32 %v340, 0.0
    %v345 = vmax.f32 %v341, 0.0
    %v346 = vpack.c.bf16 %v342, %v342
    %v347 = vpack.c.bf16 %v343, %v343
    %v348 = vpack.c.bf16 %v344, %v344
    %v349 = vpack.c.bf16 %v345, %v345
    %v350 = vld [vmem:[%s5] sm:$0xff]
    %v351 = vld [vmem:[%s5 + $0x8] sm:$0xff]
    %v352 = vld [vmem:[%s5 + $0x10] sm:$0xff]
    %v353 = vld [vmem:[%s5 + $0x18] sm:$0xff]
    %v354 = vld [vmem:[%s5 + $0x20] sm:$0xff]
    %v355 = vld [vmem:[%s5 + $0x28] sm:$0xff]
    %v356 = vld [vmem:[%s5 + $0x30] sm:$0xff]
    %v357 = vld [vmem:[%s5 + $0x38] sm:$0xff]
    %v358 = vld [vmem:[%s5 + $0x40] sm:$0xff]
    %v359 = vld [vmem:[%s5 + $0x48] sm:$0xff]
    %v360 = vld [vmem:[%s5 + $0x50] sm:$0xff]
    %v361 = vld [vmem:[%s5 + $0x58] sm:$0xff]
    %v362 = vld [vmem:[%s5 + $0x60] sm:$0xff]
    %v363 = vld [vmem:[%s5 + $0x68] sm:$0xff]
    %v364 = vld [vmem:[%s5 + $0x70] sm:$0xff]
    %v365 = vld [vmem:[%s5 + $0x78] sm:$0xff]
    %v366 = vld [vmem:[%s5 + $0x80] sm:$0xff]
    %v367 = vld [vmem:[%s5 + $0x88] sm:$0xff]
    %v368 = vld [vmem:[%s5 + $0x90] sm:$0xff]
    %v369 = vld [vmem:[%s5 + $0x98] sm:$0xff]
    %v370 = vld [vmem:[%s5 + $0xa0] sm:$0xff]
    %v371 = vld [vmem:[%s5 + $0xa8] sm:$0xff]
    %v372 = vld [vmem:[%s5 + $0xb0] sm:$0xff]
    %v373 = vld [vmem:[%s5 + $0xb8] sm:$0xff]
    %v374 = vld [vmem:[%s5 + $0xc0] sm:$0xff]
    %v375 = vld [vmem:[%s5 + $0xc8] sm:$0xff]
    %v376 = vld [vmem:[%s5 + $0xd0] sm:$0xff]
    %v377 = vld [vmem:[%s5 + $0xd8] sm:$0xff]
    %v378 = vld [vmem:[%s5 + $0xe0] sm:$0xff]
    %v379 = vld [vmem:[%s5 + $0xe8] sm:$0xff]
    %v380 = vld [vmem:[%s5 + $0xf0] sm:$0xff]
    %v381 = vld [vmem:[%s5 + $0xf8] sm:$0xff]
    %v382 = vld [vmem:[%s6] sm:$0x3]
    %v384 = vlaneseq
    %v385 = vshrl.u32 %v384, 7
    %v386 = vsub.s32 0, %v385
    %v387 = vrot.slane %v382, %v386
    %v388 = vlaneseq
    %v389 = vshrl.u32 %v388, 7
    %v390 = vsub.s32 1, %v389
    %v391 = vrot.slane %v382, %v390
    %v426 = vunpack.c.l.b16 %v350
    %v427 = vunpack.c.h.b16 %v350
    %v428 = vunpack.c.l.b16 %v351
    %v429 = vunpack.c.h.b16 %v351
    %v430 = vunpack.c.l.b16 %v352
    %v431 = vunpack.c.h.b16 %v352
    %v432 = vunpack.c.l.b16 %v353
    %v433 = vunpack.c.h.b16 %v353
    %v434 = vunpack.c.l.b16 %v354
    %v435 = vunpack.c.h.b16 %v354
    %v436 = vunpack.c.l.b16 %v355
    %v437 = vunpack.c.h.b16 %v355
    %v438 = vunpack.c.l.b16 %v356
    %v439 = vunpack.c.h.b16 %v356
    %v440 = vunpack.c.l.b16 %v357
    %v441 = vunpack.c.h.b16 %v357
    %v442 = vunpack.c.l.b16 %v358
    %v443 = vunpack.c.h.b16 %v358
    %v444 = vunpack.c.l.b16 %v359
    %v445 = vunpack.c.h.b16 %v359
    %v446 = vunpack.c.l.b16 %v360
    %v447 = vunpack.c.h.b16 %v360
    %v448 = vunpack.c.l.b16 %v361
    %v449 = vunpack.c.h.b16 %v361
    %v450 = vunpack.c.l.b16 %v362
    %v451 = vunpack.c.h.b16 %v362
    %v452 = vunpack.c.l.b16 %v363
    %v453 = vunpack.c.h.b16 %v363
    %v454 = vunpack.c.l.b16 %v364
    %v455 = vunpack.c.h.b16 %v364
    %v456 = vunpack.c.l.b16 %v365
    %v457 = vunpack.c.h.b16 %v365
    %v458 = vunpack.c.l.b16 %v366
    %v459 = vunpack.c.h.b16 %v366
    %v460 = vunpack.c.l.b16 %v367
    %v461 = vunpack.c.h.b16 %v367
    %v462 = vunpack.c.l.b16 %v368
    %v463 = vunpack.c.h.b16 %v368
    %v464 = vunpack.c.l.b16 %v369
    %v465 = vunpack.c.h.b16 %v369
    %v466 = vunpack.c.l.b16 %v370
    %v467 = vunpack.c.h.b16 %v370
    %v468 = vunpack.c.l.b16 %v371
    %v469 = vunpack.c.h.b16 %v371
    %v470 = vunpack.c.l.b16 %v372
    %v471 = vunpack.c.h.b16 %v372
    %v472 = vunpack.c.l.b16 %v373
    %v473 = vunpack.c.h.b16 %v373
    %v474 = vunpack.c.l.b16 %v374
    %v475 = vunpack.c.h.b16 %v374
    %v476 = vunpack.c.l.b16 %v375
    %v477 = vunpack.c.h.b16 %v375
    %v478 = vunpack.c.l.b16 %v376
    %v479 = vunpack.c.h.b16 %v376
    %v480 = vunpack.c.l.b16 %v377
    %v481 = vunpack.c.h.b16 %v377
    %v482 = vunpack.c.l.b16 %v378
    %v483 = vunpack.c.h.b16 %v378
    %v484 = vunpack.c.l.b16 %v379
    %v485 = vunpack.c.h.b16 %v379
    %v486 = vunpack.c.l.b16 %v380
    %v487 = vunpack.c.h.b16 %v380
    %v488 = vunpack.c.l.b16 %v381
    %v489 = vunpack.c.h.b16 %v381
    %v490 = vpack.c.b16 %v428, %v426
    %v491 = vpack.c.b16 %v429, %v427
    %v492 = vpack.c.b16 %v432, %v430
    %v493 = vpack.c.b16 %v433, %v431
    %v494 = vpack.c.b16 %v436, %v434
    %v495 = vpack.c.b16 %v437, %v435
    %v496 = vpack.c.b16 %v440, %v438
    %v497 = vpack.c.b16 %v441, %v439
    %v498 = vpack.c.b16 %v444, %v442
    %v499 = vpack.c.b16 %v445, %v443
    %v500 = vpack.c.b16 %v448, %v446
    %v501 = vpack.c.b16 %v449, %v447
    %v502 = vpack.c.b16 %v452, %v450
    %v503 = vpack.c.b16 %v453, %v451
    %v504 = vpack.c.b16 %v456, %v454
    %v505 = vpack.c.b16 %v457, %v455
    %v506 = vpack.c.b16 %v460, %v458
    %v507 = vpack.c.b16 %v461, %v459
    %v508 = vpack.c.b16 %v464, %v462
    %v509 = vpack.c.b16 %v465, %v463
    %v510 = vpack.c.b16 %v468, %v466
    %v511 = vpack.c.b16 %v469, %v467
    %v512 = vpack.c.b16 %v472, %v470
    %v513 = vpack.c.b16 %v473, %v471
    %v514 = vpack.c.b16 %v476, %v474
    %v515 = vpack.c.b16 %v477, %v475
    %v516 = vpack.c.b16 %v480, %v478
    %v517 = vpack.c.b16 %v481, %v479
    %v518 = vpack.c.b16 %v484, %v482
    %v519 = vpack.c.b16 %v485, %v483
    %v520 = vpack.c.b16 %v488, %v486
    %v521 = vpack.c.b16 %v489, %v487
    %554 = vmatprep.subr.bf16.mxu0 %v505
    %555 = vmatpush1.bf16.msra.mxu0 %v504
    %556 = vmatprep.subr.bf16.mxu0 %v503
    %557 = vmatpush1.bf16.msra.mxu0 %v502
    %558 = vmatprep.subr.bf16.mxu0 %v501
    %559 = vmatpush1.bf16.msra.mxu0 %v500
    %560 = vmatprep.subr.bf16.mxu0 %v499
    %561 = vmatpush1.bf16.msra.mxu0 %v498
    %562 = vmatprep.subr.bf16.mxu0 %v497
    %563 = vmatpush1.bf16.msra.mxu0 %v496
    %564 = vmatprep.subr.bf16.mxu0 %v495
    %565 = vmatpush1.bf16.msra.mxu0 %v494
    %566 = vmatprep.subr.bf16.mxu0 %v493
    %567 = vmatpush1.bf16.msra.mxu0 %v492
    %568 = vmatprep.subr.bf16.mxu0 %v491
    %569 = vmatpush1.bf16.msra.mxu0 %v490
    %570 = vmatprep.subr.bf16.mxu0 %v521
    %571 = vmatpush2.bf16.msra.mxu0 %v520
    %572 = vmatprep.subr.bf16.mxu0 %v519
    %573 = vmatpush2.bf16.msra.mxu0 %v518
    %574 = vmatprep.subr.bf16.mxu0 %v517
    %575 = vmatpush2.bf16.msra.mxu0 %v516
    %576 = vmatprep.subr.bf16.mxu0 %v515
    %577 = vmatpush2.bf16.msra.mxu0 %v514
    %578 = vmatprep.subr.bf16.mxu0 %v513
    %579 = vmatpush2.bf16.msra.mxu0 %v512
    %580 = vmatprep.subr.bf16.mxu0 %v511
    %581 = vmatpush2.bf16.msra.mxu0 %v510
    %582 = vmatprep.subr.bf16.mxu0 %v509
    %583 = vmatpush2.bf16.msra.mxu0 %v508
    %584 = vmatprep.subr.bf16.mxu0 %v507
    %585 = vmatpush2.bf16.msra.mxu0 %v506
    %586 = vmatprep.mubr.bf16.mxu0 %v347
    %587 = vmatmul.mubr.bf16.gmra.mxu0 %v346
    %v588 = vpop.f32.mrf.mxu0
    %v589 = vadd.f32 %v387, %v588
    %v590 = vpop.f32.mrf.mxu0
    %v591 = vadd.f32 %v391, %v590
    %v592 = vpop.f32.mrf.mxu0
    %v593 = vpop.f32.mrf.mxu0
    %594 = vdwg.mxu0
    %v595 = vmax.f32 %v589, 0.0
    %v596 = vmax.f32 %v591, 0.0
    %v597 = vld [vmem:[#allocation4] sm:$0xff]
    %v598 = vld [vmem:[#allocation4 + $0x8] sm:$0xff]
    %v599 = vld [vmem:[#allocation4 + $0x10] sm:$0xff]
    %v600 = vld [vmem:[#allocation4 + $0x18] sm:$0xff]
    %v601 = vld [vmem:[#allocation4 + $0x20] sm:$0xff]
    %v602 = vld [vmem:[#allocation4 + $0x28] sm:$0xff]
    %v603 = vld [vmem:[#allocation4 + $0x30] sm:$0xff]
    %v604 = vld [vmem:[#allocation4 + $0x38] sm:$0xff]
    %v605 = vld [vmem:[#allocation4 + $0x40] sm:$0xff]
    %v606 = vld [vmem:[#allocation4 + $0x48] sm:$0xff]
    %v607 = vld [vmem:[#allocation4 + $0x50] sm:$0xff]
    %v608 = vld [vmem:[#allocation4 + $0x58] sm:$0xff]
    %v609 = vld [vmem:[#allocation4 + $0x60] sm:$0xff]
    %v610 = vld [vmem:[#allocation4 + $0x68] sm:$0xff]
    %v611 = vld [vmem:[#allocation4 + $0x70] sm:$0xff]
    %v612 = vld [vmem:[#allocation4 + $0x78] sm:$0xff]
    %v613 = vld [vmem:[#allocation4 + $0x80] sm:$0xff]
    %v614 = vld [vmem:[#allocation4 + $0x88] sm:$0xff]
    %v615 = vld [vmem:[#allocation4 + $0x90] sm:$0xff]
    %v616 = vld [vmem:[#allocation4 + $0x98] sm:$0xff]
    %v617 = vld [vmem:[#allocation4 + $0xa0] sm:$0xff]
    %v618 = vld [vmem:[#allocation4 + $0xa8] sm:$0xff]
    %v619 = vld [vmem:[#allocation4 + $0xb0] sm:$0xff]
    %v620 = vld [vmem:[#allocation4 + $0xb8] sm:$0xff]
    %v621 = vld [vmem:[#allocation4 + $0xc0] sm:$0xff]
    %v622 = vld [vmem:[#allocation4 + $0xc8] sm:$0xff]
    %v623 = vld [vmem:[#allocation4 + $0xd0] sm:$0xff]
    %v624 = vld [vmem:[#allocation4 + $0xd8] sm:$0xff]
    %v625 = vld [vmem:[#allocation4 + $0xe0] sm:$0xff]
    %v626 = vld [vmem:[#allocation4 + $0xe8] sm:$0xff]
    %v627 = vld [vmem:[#allocation4 + $0xf0] sm:$0xff]
    %v628 = vld [vmem:[#allocation4 + $0xf8] sm:$0xff]
    %v629 = vld [vmem:[#allocation6] sm:$0x3]
    %v631 = vlaneseq
    %v632 = vshrl.u32 %v631, 7
    %v633 = vsub.s32 0, %v632
    %v634 = vrot.slane %v629, %v633
    %v635 = vlaneseq
    %v636 = vshrl.u32 %v635, 7
    %v637 = vsub.s32 1, %v636
    %v638 = vrot.slane %v629, %v637
    %v673 = vunpack.c.l.b16 %v597
    %v674 = vunpack.c.h.b16 %v597
    %v675 = vunpack.c.l.b16 %v598
    %v676 = vunpack.c.h.b16 %v598
    %v677 = vunpack.c.l.b16 %v599
    %v678 = vunpack.c.h.b16 %v599
    %v679 = vunpack.c.l.b16 %v600
    %v680 = vunpack.c.h.b16 %v600
    %v681 = vunpack.c.l.b16 %v601
    %v682 = vunpack.c.h.b16 %v601
    %v683 = vunpack.c.l.b16 %v602
    %v684 = vunpack.c.h.b16 %v602
    %v685 = vunpack.c.l.b16 %v603
    %v686 = vunpack.c.h.b16 %v603
    %v687 = vunpack.c.l.b16 %v604
    %v688 = vunpack.c.h.b16 %v604
    %v689 = vunpack.c.l.b16 %v605
    %v690 = vunpack.c.h.b16 %v605
    %v691 = vunpack.c.l.b16 %v606
    %v692 = vunpack.c.h.b16 %v606
    %v693 = vunpack.c.l.b16 %v607
    %v694 = vunpack.c.h.b16 %v607
    %v695 = vunpack.c.l.b16 %v608
    %v696 = vunpack.c.h.b16 %v608
    %v697 = vunpack.c.l.b16 %v609
    %v698 = vunpack.c.h.b16 %v609
    %v699 = vunpack.c.l.b16 %v610
    %v700 = vunpack.c.h.b16 %v610
    %v701 = vunpack.c.l.b16 %v611
    %v702 = vunpack.c.h.b16 %v611
    %v703 = vunpack.c.l.b16 %v612
    %v704 = vunpack.c.h.b16 %v612
    %v705 = vunpack.c.l.b16 %v613
    %v706 = vunpack.c.h.b16 %v613
    %v707 = vunpack.c.l.b16 %v614
    %v708 = vunpack.c.h.b16 %v614
    %v709 = vunpack.c.l.b16 %v615
    %v710 = vunpack.c.h.b16 %v615
    %v711 = vunpack.c.l.b16 %v616
    %v712 = vunpack.c.h.b16 %v616
    %v713 = vunpack.c.l.b16 %v617
    %v714 = vunpack.c.h.b16 %v617
    %v715 = vunpack.c.l.b16 %v618
    %v716 = vunpack.c.h.b16 %v618
    %v717 = vunpack.c.l.b16 %v619
    %v718 = vunpack.c.h.b16 %v619
    %v719 = vunpack.c.l.b16 %v620
    %v720 = vunpack.c.h.b16 %v620
    %v721 = vunpack.c.l.b16 %v621
    %v722 = vunpack.c.h.b16 %v621
    %v723 = vunpack.c.l.b16 %v622
    %v724 = vunpack.c.h.b16 %v622
    %v725 = vunpack.c.l.b16 %v623
    %v726 = vunpack.c.h.b16 %v623
    %v727 = vunpack.c.l.b16 %v624
    %v728 = vunpack.c.h.b16 %v624
    %v729 = vunpack.c.l.b16 %v625
    %v730 = vunpack.c.h.b16 %v625
    %v731 = vunpack.c.l.b16 %v626
    %v732 = vunpack.c.h.b16 %v626
    %v733 = vunpack.c.l.b16 %v627
    %v734 = vunpack.c.h.b16 %v627
    %v735 = vunpack.c.l.b16 %v628
    %v736 = vunpack.c.h.b16 %v628
    %v737 = vpack.c.b16 %v675, %v673
    %v738 = vpack.c.b16 %v676, %v674
    %v739 = vpack.c.b16 %v679, %v677
    %v740 = vpack.c.b16 %v680, %v678
    %v741 = vpack.c.b16 %v683, %v681
    %v742 = vpack.c.b16 %v684, %v682
    %v743 = vpack.c.b16 %v687, %v685
    %v744 = vpack.c.b16 %v688, %v686
    %v745 = vpack.c.b16 %v691, %v689
    %v746 = vpack.c.b16 %v692, %v690
    %v747 = vpack.c.b16 %v695, %v693
    %v748 = vpack.c.b16 %v696, %v694
    %v749 = vpack.c.b16 %v699, %v697
    %v750 = vpack.c.b16 %v700, %v698
    %v751 = vpack.c.b16 %v703, %v701
    %v752 = vpack.c.b16 %v704, %v702
    %v753 = vpack.c.b16 %v707, %v705
    %v754 = vpack.c.b16 %v708, %v706
    %v755 = vpack.c.b16 %v711, %v709
    %v756 = vpack.c.b16 %v712, %v710
    %v757 = vpack.c.b16 %v715, %v713
    %v758 = vpack.c.b16 %v716, %v714
    %v759 = vpack.c.b16 %v719, %v717
    %v760 = vpack.c.b16 %v720, %v718
    %v761 = vpack.c.b16 %v723, %v721
    %v762 = vpack.c.b16 %v724, %v722
    %v763 = vpack.c.b16 %v727, %v725
    %v764 = vpack.c.b16 %v728, %v726
    %v765 = vpack.c.b16 %v731, %v729
    %v766 = vpack.c.b16 %v732, %v730
    %v767 = vpack.c.b16 %v735, %v733
    %v768 = vpack.c.b16 %v736, %v734
    %801 = vmatprep.subr.bf16.mxu0 %v752
    %802 = vmatpush1.bf16.msra.mxu0 %v751
    %803 = vmatprep.subr.bf16.mxu0 %v750
    %804 = vmatpush1.bf16.msra.mxu0 %v749
    %805 = vmatprep.subr.bf16.mxu0 %v748
    %806 = vmatpush1.bf16.msra.mxu0 %v747
    %807 = vmatprep.subr.bf16.mxu0 %v746
    %808 = vmatpush1.bf16.msra.mxu0 %v745
    %809 = vmatprep.subr.bf16.mxu0 %v744
    %810 = vmatpush1.bf16.msra.mxu0 %v743
    %811 = vmatprep.subr.bf16.mxu0 %v742
    %812 = vmatpush1.bf16.msra.mxu0 %v741
    %813 = vmatprep.subr.bf16.mxu0 %v740
    %814 = vmatpush1.bf16.msra.mxu0 %v739
    %815 = vmatprep.subr.bf16.mxu0 %v738
    %816 = vmatpush1.bf16.msra.mxu0 %v737
    %817 = vmatprep.subr.bf16.mxu0 %v768
    %818 = vmatpush2.bf16.msra.mxu0 %v767
    %819 = vmatprep.subr.bf16.mxu0 %v766
    %820 = vmatpush2.bf16.msra.mxu0 %v765
    %821 = vmatprep.subr.bf16.mxu0 %v764
    %822 = vmatpush2.bf16.msra.mxu0 %v763
    %823 = vmatprep.subr.bf16.mxu0 %v762
    %824 = vmatpush2.bf16.msra.mxu0 %v761
    %825 = vmatprep.subr.bf16.mxu0 %v760
    %826 = vmatpush2.bf16.msra.mxu0 %v759
    %827 = vmatprep.subr.bf16.mxu0 %v758
    %828 = vmatpush2.bf16.msra.mxu0 %v757
    %829 = vmatprep.subr.bf16.mxu0 %v756
    %830 = vmatpush2.bf16.msra.mxu0 %v755
    %831 = vmatprep.subr.bf16.mxu0 %v754
    %832 = vmatpush2.bf16.msra.mxu0 %v753
    %833 = vmatprep.mubr.bf16.mxu0 %v349
    %834 = vmatmul.mubr.bf16.gmra.mxu0 %v348
    %v835 = vpop.f32.mrf.mxu0
    %v836 = vadd.f32 %v634, %v835
    %v837 = vpop.f32.mrf.mxu0
    %v838 = vadd.f32 %v638, %v837
    %v839 = vpop.f32.mrf.mxu0
    %v840 = vpop.f32.mrf.mxu0
    %841 = vdwg.mxu0
    %v842 = vmax.f32 %v836, 0.0
    %v843 = vmax.f32 %v838, 0.0
    %v844 = vpack.c.bf16 %v595, %v595
    %v845 = vpack.c.bf16 %v596, %v596
    %v846 = vld [vmem:[%s9] sm:$0xf]
    %v847 = vld [vmem:[%s9 + $0x4] sm:$0xf]
    %v848 = vld [vmem:[%s9 + $0x8] sm:$0xf]
    %v849 = vld [vmem:[%s9 + $0xc] sm:$0xf]
    %v850 = vld [vmem:[%s9 + $0x10] sm:$0xf]
    %v851 = vld [vmem:[%s9 + $0x14] sm:$0xf]
    %v852 = vld [vmem:[%s9 + $0x18] sm:$0xf]
    %v853 = vld [vmem:[%s9 + $0x1c] sm:$0xf]
    %v854 = vld [vmem:[%s9 + $0x20] sm:$0xf]
    %v855 = vld [vmem:[%s9 + $0x24] sm:$0xf]
    %v856 = vld [vmem:[%s9 + $0x28] sm:$0xf]
    %v857 = vld [vmem:[%s9 + $0x2c] sm:$0xf]
    %v858 = vld [vmem:[%s9 + $0x30] sm:$0xf]
    %v859 = vld [vmem:[%s9 + $0x34] sm:$0xf]
    %v860 = vld [vmem:[%s9 + $0x38] sm:$0xf]
    %v861 = vld [vmem:[%s9 + $0x3c] sm:$0xf]
    %v862 = vld [vmem:[%s9 + $0x40] sm:$0xf]
    %v863 = vld [vmem:[%s9 + $0x44] sm:$0xf]
    %v864 = vld [vmem:[%s9 + $0x48] sm:$0xf]
    %v865 = vld [vmem:[%s9 + $0x4c] sm:$0xf]
    %v866 = vld [vmem:[%s9 + $0x50] sm:$0xf]
    %v867 = vld [vmem:[%s9 + $0x54] sm:$0xf]
    %v868 = vld [vmem:[%s9 + $0x58] sm:$0xf]
    %v869 = vld [vmem:[%s9 + $0x5c] sm:$0xf]
    %v870 = vld [vmem:[%s9 + $0x60] sm:$0xf]
    %v871 = vld [vmem:[%s9 + $0x64] sm:$0xf]
    %v872 = vld [vmem:[%s9 + $0x68] sm:$0xf]
    %v873 = vld [vmem:[%s9 + $0x6c] sm:$0xf]
    %v874 = vld [vmem:[%s9 + $0x70] sm:$0xf]
    %v875 = vld [vmem:[%s9 + $0x74] sm:$0xf]
    %v876 = vld [vmem:[%s9 + $0x78] sm:$0xf]
    %v877 = vld [vmem:[%s9 + $0x7c] sm:$0xf]
    %v878 = vpack.c.bf16 %v842, %v842
    %v879 = vpack.c.bf16 %v843, %v843
    %v880 = vld [vmem:[%s10] sm:$0xf]
    %v881 = vld [vmem:[%s10 + $0x4] sm:$0xf]
    %v882 = vld [vmem:[%s10 + $0x8] sm:$0xf]
    %v883 = vld [vmem:[%s10 + $0xc] sm:$0xf]
    %v884 = vld [vmem:[%s10 + $0x10] sm:$0xf]
    %v885 = vld [vmem:[%s10 + $0x14] sm:$0xf]
    %v886 = vld [vmem:[%s10 + $0x18] sm:$0xf]
    %v887 = vld [vmem:[%s10 + $0x1c] sm:$0xf]
    %v888 = vld [vmem:[%s10 + $0x20] sm:$0xf]
    %v889 = vld [vmem:[%s10 + $0x24] sm:$0xf]
    %v890 = vld [vmem:[%s10 + $0x28] sm:$0xf]
    %v891 = vld [vmem:[%s10 + $0x2c] sm:$0xf]
    %v892 = vld [vmem:[%s10 + $0x30] sm:$0xf]
    %v893 = vld [vmem:[%s10 + $0x34] sm:$0xf]
    %v894 = vld [vmem:[%s10 + $0x38] sm:$0xf]
    %v895 = vld [vmem:[%s10 + $0x3c] sm:$0xf]
    %v896 = vld [vmem:[%s10 + $0x40] sm:$0xf]
    %v897 = vld [vmem:[%s10 + $0x44] sm:$0xf]
    %v898 = vld [vmem:[%s10 + $0x48] sm:$0xf]
    %v899 = vld [vmem:[%s10 + $0x4c] sm:$0xf]
    %v900 = vld [vmem:[%s10 + $0x50] sm:$0xf]
    %v901 = vld [vmem:[%s10 + $0x54] sm:$0xf]
    %v902 = vld [vmem:[%s10 + $0x58] sm:$0xf]
    %v903 = vld [vmem:[%s10 + $0x5c] sm:$0xf]
    %v904 = vld [vmem:[%s10 + $0x60] sm:$0xf]
    %v905 = vld [vmem:[%s10 + $0x64] sm:$0xf]
    %v906 = vld [vmem:[%s10 + $0x68] sm:$0xf]
    %v907 = vld [vmem:[%s10 + $0x6c] sm:$0xf]
    %v908 = vld [vmem:[%s10 + $0x70] sm:$0xf]
    %v909 = vld [vmem:[%s10 + $0x74] sm:$0xf]
    %v910 = vld [vmem:[%s10 + $0x78] sm:$0xf]
    %v911 = vld [vmem:[%s10 + $0x7c] sm:$0xf]
    %v944 = vunpack.c.l.b16 %v880
    %v945 = vunpack.c.l.b16 %v881
    %v946 = vunpack.c.l.b16 %v882
    %v947 = vunpack.c.l.b16 %v883
    %v948 = vunpack.c.l.b16 %v884
    %v949 = vunpack.c.l.b16 %v885
    %v950 = vunpack.c.l.b16 %v886
    %v951 = vunpack.c.l.b16 %v887
    %v952 = vunpack.c.l.b16 %v888
    %v953 = vunpack.c.l.b16 %v889
    %v954 = vunpack.c.l.b16 %v890
    %v955 = vunpack.c.l.b16 %v891
    %v956 = vunpack.c.l.b16 %v892
    %v957 = vunpack.c.l.b16 %v893
    %v958 = vunpack.c.l.b16 %v894
    %v959 = vunpack.c.l.b16 %v895
    %v960 = vunpack.c.l.b16 %v896
    %v961 = vunpack.c.l.b16 %v897
    %v962 = vunpack.c.l.b16 %v898
    %v963 = vunpack.c.l.b16 %v899
    %v964 = vunpack.c.l.b16 %v900
    %v965 = vunpack.c.l.b16 %v901
    %v966 = vunpack.c.l.b16 %v902
    %v967 = vunpack.c.l.b16 %v903
    %v968 = vunpack.c.l.b16 %v904
    %v969 = vunpack.c.l.b16 %v905
    %v970 = vunpack.c.l.b16 %v906
    %v971 = vunpack.c.l.b16 %v907
    %v972 = vunpack.c.l.b16 %v908
    %v973 = vunpack.c.l.b16 %v909
    %v974 = vunpack.c.l.b16 %v910
    %v975 = vunpack.c.l.b16 %v911
    %v976 = vpack.c.b16 %v945, %v944
    %v977 = vpack.c.b16 %v947, %v946
    %v978 = vpack.c.b16 %v949, %v948
    %v979 = vpack.c.b16 %v951, %v950
    %v980 = vpack.c.b16 %v953, %v952
    %v981 = vpack.c.b16 %v955, %v954
    %v982 = vpack.c.b16 %v957, %v956
    %v983 = vpack.c.b16 %v959, %v958
    %v984 = vpack.c.b16 %v961, %v960
    %v985 = vpack.c.b16 %v963, %v962
    %v986 = vpack.c.b16 %v965, %v964
    %v987 = vpack.c.b16 %v967, %v966
    %v988 = vpack.c.b16 %v969, %v968
    %v989 = vpack.c.b16 %v971, %v970
    %v990 = vpack.c.b16 %v973, %v972
    %v991 = vpack.c.b16 %v975, %v974
    %1008 = vmatprep.subr.bf16.mxu0 0
    %1009 = vmatpush1.bf16.msra.mxu0 %v983
    %1010 = vmatprep.subr.bf16.mxu0 0
    %1011 = vmatpush1.bf16.msra.mxu0 %v982
    %1012 = vmatprep.subr.bf16.mxu0 0
    %1013 = vmatpush1.bf16.msra.mxu0 %v981
    %1014 = vmatprep.subr.bf16.mxu0 0
    %1015 = vmatpush1.bf16.msra.mxu0 %v980
    %1016 = vmatprep.subr.bf16.mxu0 0
    %1017 = vmatpush1.bf16.msra.mxu0 %v979
    %1018 = vmatprep.subr.bf16.mxu0 0
    %1019 = vmatpush1.bf16.msra.mxu0 %v978
    %1020 = vmatprep.subr.bf16.mxu0 0
    %1021 = vmatpush1.bf16.msra.mxu0 %v977
    %1022 = vmatprep.subr.bf16.mxu0 0
    %1023 = vmatpush1.bf16.msra.mxu0 %v976
    %1024 = vmatprep.subr.bf16.mxu0 0
    %1025 = vmatpush2.bf16.msra.mxu0 %v991
    %1026 = vmatprep.subr.bf16.mxu0 0
    %1027 = vmatpush2.bf16.msra.mxu0 %v990
    %1028 = vmatprep.subr.bf16.mxu0 0
    %1029 = vmatpush2.bf16.msra.mxu0 %v989
    %1030 = vmatprep.subr.bf16.mxu0 0
    %1031 = vmatpush2.bf16.msra.mxu0 %v988
    %1032 = vmatprep.subr.bf16.mxu0 0
    %1033 = vmatpush2.bf16.msra.mxu0 %v987
    %1034 = vmatprep.subr.bf16.mxu0 0
    %1035 = vmatpush2.bf16.msra.mxu0 %v986
    %1036 = vmatprep.subr.bf16.mxu0 0
    %1037 = vmatpush2.bf16.msra.mxu0 %v985
    %1038 = vmatprep.subr.bf16.mxu0 0
    %1039 = vmatpush2.bf16.msra.mxu0 %v984
    %1040 = vmatprep.mubr.bf16.mxu0 %v879
    %1041 = vmatmul.mubr.bf16.gmra.mxu0 %v878
    %v1042 = vpop.f32.mrf.mxu0
    %v1043 = vadd.f32 0.0, %v1042
    %v1044 = vpop.f32.mrf.mxu0
    %v1045 = vpop.f32.mrf.mxu0
    %v1046 = vpop.f32.mrf.mxu0
    %1047 = vdwg.mxu0
    %v1080 = vunpack.c.l.b16 %v846
    %v1081 = vunpack.c.l.b16 %v847
    %v1082 = vunpack.c.l.b16 %v848
    %v1083 = vunpack.c.l.b16 %v849
    %v1084 = vunpack.c.l.b16 %v850
    %v1085 = vunpack.c.l.b16 %v851
    %v1086 = vunpack.c.l.b16 %v852
    %v1087 = vunpack.c.l.b16 %v853
    %v1088 = vunpack.c.l.b16 %v854
    %v1089 = vunpack.c.l.b16 %v855
    %v1090 = vunpack.c.l.b16 %v856
    %v1091 = vunpack.c.l.b16 %v857
    %v1092 = vunpack.c.l.b16 %v858
    %v1093 = vunpack.c.l.b16 %v859
    %v1094 = vunpack.c.l.b16 %v860
    %v1095 = vunpack.c.l.b16 %v861
    %v1096 = vunpack.c.l.b16 %v862
    %v1097 = vunpack.c.l.b16 %v863
    %v1098 = vunpack.c.l.b16 %v864
    %v1099 = vunpack.c.l.b16 %v865
    %v1100 = vunpack.c.l.b16 %v866
    %v1101 = vunpack.c.l.b16 %v867
    %v1102 = vunpack.c.l.b16 %v868
    %v1103 = vunpack.c.l.b16 %v869
    %v1104 = vunpack.c.l.b16 %v870
    %v1105 = vunpack.c.l.b16 %v871
    %v1106 = vunpack.c.l.b16 %v872
    %v1107 = vunpack.c.l.b16 %v873
    %v1108 = vunpack.c.l.b16 %v874
    %v1109 = vunpack.c.l.b16 %v875
    %v1110 = vunpack.c.l.b16 %v876
    %v1111 = vunpack.c.l.b16 %v877
    %v1112 = vpack.c.b16 %v1081, %v1080
    %v1113 = vpack.c.b16 %v1083, %v1082
    %v1114 = vpack.c.b16 %v1085, %v1084
    %v1115 = vpack.c.b16 %v1087, %v1086
    %v1116 = vpack.c.b16 %v1089, %v1088
    %v1117 = vpack.c.b16 %v1091, %v1090
    %v1118 = vpack.c.b16 %v1093, %v1092
    %v1119 = vpack.c.b16 %v1095, %v1094
    %v1120 = vpack.c.b16 %v1097, %v1096
    %v1121 = vpack.c.b16 %v1099, %v1098
    %v1122 = vpack.c.b16 %v1101, %v1100
    %v1123 = vpack.c.b16 %v1103, %v1102
    %v1124 = vpack.c.b16 %v1105, %v1104
    %v1125 = vpack.c.b16 %v1107, %v1106
    %v1126 = vpack.c.b16 %v1109, %v1108
    %v1127 = vpack.c.b16 %v1111, %v1110
    %1144 = vmatprep.subr.bf16.mxu0 0
    %1145 = vmatpush1.bf16.msra.mxu0 %v1119
    %1146 = vmatprep.subr.bf16.mxu0 0
    %1147 = vmatpush1.bf16.msra.mxu0 %v1118
    %1148 = vmatprep.subr.bf16.mxu0 0
    %1149 = vmatpush1.bf16.msra.mxu0 %v1117
    %1150 = vmatprep.subr.bf16.mxu0 0
    %1151 = vmatpush1.bf16.msra.mxu0 %v1116
    %1152 = vmatprep.subr.bf16.mxu0 0
    %1153 = vmatpush1.bf16.msra.mxu0 %v1115
    %1154 = vmatprep.subr.bf16.mxu0 0
    %1155 = vmatpush1.bf16.msra.mxu0 %v1114
    %1156 = vmatprep.subr.bf16.mxu0 0
    %1157 = vmatpush1.bf16.msra.mxu0 %v1113
    %1158 = vmatprep.subr.bf16.mxu0 0
    %1159 = vmatpush1.bf16.msra.mxu0 %v1112
    %1160 = vmatprep.subr.bf16.mxu0 0
    %1161 = vmatpush2.bf16.msra.mxu0 %v1127
    %1162 = vmatprep.subr.bf16.mxu0 0
    %1163 = vmatpush2.bf16.msra.mxu0 %v1126
    %1164 = vmatprep.subr.bf16.mxu0 0
    %1165 = vmatpush2.bf16.msra.mxu0 %v1125
    %1166 = vmatprep.subr.bf16.mxu0 0
    %1167 = vmatpush2.bf16.msra.mxu0 %v1124
    %1168 = vmatprep.subr.bf16.mxu0 0
    %1169 = vmatpush2.bf16.msra.mxu0 %v1123
    %1170 = vmatprep.subr.bf16.mxu0 0
    %1171 = vmatpush2.bf16.msra.mxu0 %v1122
    %1172 = vmatprep.subr.bf16.mxu0 0
    %1173 = vmatpush2.bf16.msra.mxu0 %v1121
    %1174 = vmatprep.subr.bf16.mxu0 0
    %1175 = vmatpush2.bf16.msra.mxu0 %v1120
    %1176 = vmatprep.mubr.bf16.mxu0 %v845
    %1177 = vmatmul.mubr.bf16.gmra.mxu0 %v844
    %v1178 = vpop.f32.mrf.mxu0
    %v1179 = vadd.f32 %v1043, %v1178
    %v1180 = vpop.f32.mrf.mxu0
    %v1181 = vpop.f32.mrf.mxu0
    %v1182 = vpop.f32.mrf.mxu0
    %1183 = vdwg.mxu0
    %v1184 = vld [vmem:[#allocation7] sm:$0x1]
    %v1186 = vlaneseq
    %v1187 = vshrl.u32 %v1186, 7
    %v1188 = vsub.s32 0, %v1187
    %v1189 = vrot.slane %v1184, %v1188
    %v1191 = vadd.f32 %v1179, %v1189
    %vm1192 = vcmask 15360
    %1193 = vst.msk [vmem:[%s12] sm:$0xff] %vm1192, %v1191
    // Predicated region
    $region66: #{critic_forward.1} parent=1 // pred_check
      _
    $region67: #{critic_forward.1} parent=1 // pred_check_branch
      %1195 = sbr.rel (0) target = $region69
    $region68: #{critic_forward.1} parent=1 // pred_region
      _
    $region69: #{critic_forward.1} parent=1 // pred_fallthru
      _
    // Predicated region
    $region70: #{critic_forward.1} parent=1 // pred_check
      _
    $region71: #{critic_forward.1} parent=1 // pred_check_branch
      %1197 = sbr.rel (0) target = $region73
    $region72: #{critic_forward.1} parent=1 // pred_region
      _
    $region73: #{critic_forward.1} parent=1 // pred_fallthru
      _
    %1198 = vsyncpa [#allocation3], 1
    %1199 = vsyncpa [#allocation5], 1
    %1200 = vsyncpa [#allocation8], 1

</llo_original>
